<compile_context>
chip_gen: v7x
topology: tpu7x:2x2x1
jax: 0.10.0
libtpu: 0.0.40
codegen_flags: <defaults>
</compile_context>

<pallas_src>
import jax
import jax.numpy as jnp
from jax.experimental import pallas as pl
from jax.experimental.pallas import tpu as pltpu


def _round_up(x: int, m: int) -> int:
    return ((x + m - 1) // m) * m


def idct_matrix(n: int) -> jnp.ndarray:
    """C such that torch_dct.idct(X, norm=None) == X @ C (mix along last dim)."""
    k = jnp.arange(n, dtype=jnp.float32)[:, None]
    m = jnp.arange(n, dtype=jnp.float32)[None, :]
    C = jnp.cos(jnp.pi * k * (2.0 * m + 1.0) / (2.0 * n)) / n
    C = C.at[0, :].multiply(0.5)
    return C


def build_effective_weight(w, dense_s, scale):
    """W_eff = W.T + idct_2d(dense_s) * scale, shape (in, out), f32.

    Cold path in plain XLA (two (D, D) matmuls, once per call).  The module's
    forward only works when in_features == out_features (it adds an (in, in)
    delta onto the (.., out_features) base result), so we require square.
    """
    d_out, d_in = w.shape
    if d_out != d_in:
        raise ValueError(
            "FourierFT layer_simplifyDCT semantics require in_features == "
            f"out_features (got in={d_in}, out={d_out}).")
    C = idct_matrix(d_in)
    ct_scaled = C.T * jnp.float32(scale)        # fold `scale` into left factor
    delta_w = (ct_scaled @ dense_s.astype(jnp.float32)) @ C
    return jnp.transpose(w).astype(jnp.float32) + delta_w


# ----------------------- Hot path: fused linear -----------------------
# o = x @ W_eff + b   (adapter already folded into W_eff -> single matmul)

def _fused_linear_kernel(x_ref, w_ref, b_ref, o_ref, acc_ref):
    k = pl.program_id(2)

    @pl.when(k == 0)
    def _init():
        acc_ref[...] = jnp.zeros_like(acc_ref)

    # bf16 MXU inputs, f32 accumulation.
    acc_ref[...] += jnp.dot(
        x_ref[...].astype(jnp.bfloat16),
        w_ref[...],
        preferred_element_type=jnp.float32,
    )

    @pl.when(k == pl.num_programs(2) - 1)
    def _finalize():
        o_ref[...] = (acc_ref[...] + b_ref[...]).astype(o_ref.dtype)


def _pick_tk(d_in: int) -> int:
    # K tile: a multiple of 128 that evenly divides D_in (so K tiles are never
    # partial and no wrapper-side zero-pad of x is needed), else full D_in.
    for cand in (512, 256):
        if d_in > cand and d_in % cand == 0:
            return cand
    return d_in


def _pick_n_tiling(d_out: int):
    # Lane-dense output, 256-aligned N tiles where possible (v6e/v7x MXU).
    if d_out <= 128:
        n_pad = _round_up(d_out, 128)
        return n_pad, n_pad
    n_pad = _round_up(d_out, 256)
    tn = 512 if n_pad % 512 == 0 else 256
    return n_pad, tn


def fourier_linear_forward(x, w, b, dense_s, scale, *, tm_max: int = 512):
    """x: (B, S, D_in); w: (D_out, D_in); b: (D_out,); dense_s: (D_in, D_in)."""
    B, S, d_in = x.shape
    d_out = w.shape[0]
    M = B * S

    # ---- cold path: fold the Fourier adapter into the base weight ----
    w_eff = build_effective_weight(w, dense_s, scale)        # (d_in, d_out) f32

    n_pad, tn = _pick_n_tiling(d_out)
    tk = _pick_tk(d_in)
    tm = min(tm_max, _round_up(M, 8))

    if n_pad != d_out:
        w_eff = jnp.pad(w_eff, ((0, 0), (0, n_pad - d_out)))
        b_pad = jnp.pad(b.astype(jnp.float32), (0, n_pad - d_out))
    else:
        b_pad = b.astype(jnp.float32)
    w_p = w_eff.astype(jnp.bfloat16)          # bf16 weight in HBM (half the DMA)
    b_p = b_pad.reshape(1, n_pad)

    x2d = x.reshape(M, d_in)                  # no wrapper-side pad/cast copy of x

    gm = pl.cdiv(M, tm)
    gn = n_pad // tn
    gk = pl.cdiv(d_in, tk)                    # exact: tk divides d_in or equals it

    # Explicit scoped-VMEM budget (v5e default scoped limit is only 16 MiB).
    x_bytes = jnp.dtype(x.dtype).itemsize
    o_bytes = x_bytes
    vmem_est = (2 * tm * tk * x_bytes         # x tiles (double-buffered)
                + 2 * tk * tn * 2             # bf16 weight tiles
                + 2 * tn * 4                  # bias tiles
                + 2 * tm * tn * o_bytes       # output tiles
                + tm * tn * 4)                # f32 accumulator scratch
    vmem_limit = min(64 * 1024 * 1024,
                     max(32 * 1024 * 1024, int(1.5 * vmem_est) + (4 << 20)))

    out2d = pl.pallas_call(
        _fused_linear_kernel,
        out_shape=jax.ShapeDtypeStruct((M, n_pad), x.dtype),
        grid=(gm, gn, gk),
        in_specs=[
            pl.BlockSpec((tm, tk), lambda i, j, k: (i, k)),   # x row tile
            pl.BlockSpec((tk, tn), lambda i, j, k: (k, j)),   # W_eff tile (bf16)
            pl.BlockSpec((1, tn), lambda i, j, k: (0, j)),    # bias tile
        ],
        out_specs=pl.BlockSpec((tm, tn), lambda i, j, k: (i, j)),
        scratch_shapes=[pltpu.VMEM((tm, tn), jnp.float32)],
        compiler_params=pltpu.CompilerParams(
            dimension_semantics=("parallel", "parallel", "arbitrary"),
            vmem_limit_bytes=vmem_limit,
        ),
    )(x2d, w_p, b_p)

    out = out2d[:, :d_out] if n_pad != d_out else out2d
    return out.reshape(B, S, d_out)


if __name__ == "__main__":
    # Small, deterministic synthetic configuration (in_features == out_features).
    B, S, D = 2, 8, 32
    n_frequency = 64
    scale = 0.1

    key = jax.random.PRNGKey(0)
    k_x, k_w, k_b, k_spec, k_idx = jax.random.split(key, 5)

    x = jax.random.normal(k_x, (B, S, D), dtype=jnp.float32)
    w = jax.random.normal(k_w, (D, D), dtype=jnp.float32) * 0.05   # base weight (out, in)
    b = jax.random.normal(k_b, (D,), dtype=jnp.float32) * 0.01     # base bias
    spectrum = jax.random.normal(k_spec, (n_frequency,), dtype=jnp.float32)

    # Glue (module): scatter the sparse spectrum into the dense (D, D) matrix.
    perm = jax.random.permutation(k_idx, D * D)[:n_frequency]
    rows = perm // D
    cols = perm % D
    dense_s = jnp.zeros((D, D), dtype=jnp.float32).at[rows, cols].set(spectrum)

    out = fourier_linear_forward(x, w, b, dense_s, scale)
    out = jax.block_until_ready(out)

    # Pure-JAX f32 reference for validation.
    C = idct_matrix(D)
    ref_delta_w = (C.T @ dense_s @ C) * scale
    ref = (jnp.einsum('bsd,de->bse', x, w.T) + b
           + jnp.einsum('bsd,de->bse', x, ref_delta_w))

    assert out.shape == (B, S, D) and out.dtype == x.dtype
    # bf16 MXU inputs (f32 accumulate) -> looser tolerance than pure f32.
    assert jnp.allclose(out, ref, atol=2e-2, rtol=2e-2), \
        float(jnp.max(jnp.abs(out - ref)))

    print("KERNEL_OK")
</pallas_src>

<mosaic_0001>
module attributes {stable_mosaic.version = 11 : i64} {
  func.func @_fused_linear_kernel(%arg0: i32, %arg1: i32, %arg2: i32, %arg3: memref<16x32xf32, #tpu.memory_space<vmem>>, %arg4: memref<32x128xbf16, #tpu.memory_space<vmem>>, %arg5: memref<1x128xf32, #tpu.memory_space<vmem>>, %arg6: memref<16x128xf32, #tpu.memory_space<vmem>>, %arg7: memref<16x128xf32, #tpu.memory_space<vmem>>) attributes {dimension_semantics = [#tpu.dimension_semantics<parallel>, #tpu.dimension_semantics<parallel>, #tpu.dimension_semantics<arbitrary>], iteration_bounds = array<i64: 1, 1, 1>, scalar_prefetch = 0 : i64, scratch_operands = 1 : i64, tpu.core_type = #tpu.core_type<tc>, window_params = [{transform_indices = @transform_0, window_bounds = array<i64: 16, 32>}, {transform_indices = @transform_1, window_bounds = array<i64: 32, 128>}, {transform_indices = @transform_2, window_bounds = array<i64: 1, 128>}, {transform_indices = @transform_3, window_bounds = array<i64: 16, 128>}]} {
    %c0_i32 = arith.constant 0 : i32
    %0 = arith.cmpi eq, %arg2, %c0_i32 : i32
    %1 = arith.extui %0 : i1 to i32
    %c0_i32_0 = arith.constant 0 : i32
    %2 = arith.cmpi ne, %1, %c0_i32_0 : i32
    scf.if %2 {
      %cst_10 = arith.constant 0.000000e+00 : f32
      %13 = vector.broadcast %cst_10 : f32 to vector<16x128xf32>
      %c0_11 = arith.constant 0 : index
      %c0_12 = arith.constant 0 : index
      %14 = vector.load %arg7[%c0_11, %c0_12] : memref<16x128xf32, #tpu.memory_space<vmem>>, vector<16x128xf32>
      tpu.vector_store %arg7[%c0_11, %c0_12], %13 {strides = array<i32>} : memref<16x128xf32, #tpu.memory_space<vmem>>, vector<16x128xf32>,
    } else {
    }
    %c0 = arith.constant 0 : index
    %c0_1 = arith.constant 0 : index
    %3 = vector.load %arg7[%c0, %c0_1] : memref<16x128xf32, #tpu.memory_space<vmem>>, vector<16x128xf32>
    %c0_2 = arith.constant 0 : index
    %c0_3 = arith.constant 0 : index
    %4 = vector.load %arg3[%c0_2, %c0_3] : memref<16x32xf32, #tpu.memory_space<vmem>>, vector<16x32xf32>
    %5 = arith.truncf %4 : vector<16x32xf32> to vector<16x32xbf16>
    %c0_4 = arith.constant 0 : index
    %c0_5 = arith.constant 0 : index
    %6 = vector.load %arg4[%c0_4, %c0_5] : memref<32x128xbf16, #tpu.memory_space<vmem>>, vector<32x128xbf16>
    %cst = arith.constant dense<0.000000e+00> : vector<16x128xf32>
    %7 = tpu.matmul %5, %6, %cst {dimension_numbers = #tpu.dot_dimension_numbers<[1], [0], [0], [1], [0, 0, 1, 1], [], []>} : vector<16x32xbf16>, vector<32x128xbf16>, vector<16x128xf32> -> vector<16x128xf32>
    %8 = arith.addf %3, %7 : vector<16x128xf32>
    %c0_6 = arith.constant 0 : index
    %c0_7 = arith.constant 0 : index
    %9 = vector.load %arg7[%c0_6, %c0_7] : memref<16x128xf32, #tpu.memory_space<vmem>>, vector<16x128xf32>
    tpu.vector_store %arg7[%c0_6, %c0_7], %8 {strides = array<i32>} : memref<16x128xf32, #tpu.memory_space<vmem>>, vector<16x128xf32>,
    %c0_i32_8 = arith.constant 0 : i32
    %10 = arith.cmpi eq, %arg2, %c0_i32_8 : i32
    %11 = arith.extui %10 : i1 to i32
    %c0_i32_9 = arith.constant 0 : i32
    %12 = arith.cmpi ne, %11, %c0_i32_9 : i32
    scf.if %12 {
      %c0_10 = arith.constant 0 : index
      %c0_11 = arith.constant 0 : index
      %13 = vector.load %arg7[%c0_10, %c0_11] : memref<16x128xf32, #tpu.memory_space<vmem>>, vector<16x128xf32>
      %c0_12 = arith.constant 0 : index
      %c0_13 = arith.constant 0 : index
      %14 = vector.load %arg5[%c0_12, %c0_13] : memref<1x128xf32, #tpu.memory_space<vmem>>, vector<1x128xf32>
      %15 = vector.broadcast %14 : vector<1x128xf32> to vector<16x128xf32>
      %16 = arith.addf %13, %15 : vector<16x128xf32>
      %c0_14 = arith.constant 0 : index
      %c0_15 = arith.constant 0 : index
      %17 = vector.load %arg6[%c0_14, %c0_15] : memref<16x128xf32, #tpu.memory_space<vmem>>, vector<16x128xf32>
      tpu.vector_store %arg6[%c0_14, %c0_15], %16 {strides = array<i32>} : memref<16x128xf32, #tpu.memory_space<vmem>>, vector<16x128xf32>,
    } else {
    }
    return
  }
  func.func @transform_0(%arg0: i32, %arg1: i32, %arg2: i32) -> (i32, i32) {
    %c0_i32 = arith.constant 0 : i32
    return %arg0, %arg2 : i32, i32
  }
  func.func @transform_1(%arg0: i32, %arg1: i32, %arg2: i32) -> (i32, i32) {
    %c0_i32 = arith.constant 0 : i32
    return %arg2, %arg1 : i32, i32
  }
  func.func @transform_2(%arg0: i32, %arg1: i32, %arg2: i32) -> (i32, i32) {
    %c0_i32 = arith.constant 0 : i32
    %c0_i32_0 = arith.constant 0 : i32
    return %c0_i32, %arg1 : i32, i32
  }
  func.func @transform_3(%arg0: i32, %arg1: i32, %arg2: i32) -> (i32, i32) {
    %c0_i32 = arith.constant 0 : i32
    return %arg0, %arg1 : i32, i32
  }
}

</mosaic_0001>

<llo_original>
// kernel: tpu_custom_call.1
$region0: #{tpu_custom_call.1}
  #allocation0 [shape = 'u32[]', space=smem, size = 0x4, offset = 0x4, fixed_abs, tag = 'smem constant byte address 0x4 - core index']
  #allocation1 [shape = 'u32[144,128]{1,0:T(1,128)}', space=vmem, size = 0x12000, scoped, tag = 'internal scratch']
  #allocation2 [shape = 'f32[16,128]{1,0:T(8,128)}', space=vmem, size = 0x2000, scoped, tag = 'scratch operand']
  %s0 = inlined_call_operand.hbm [shape: f32[16,32], index: 0, kind: input, shape index: {}]
  %s1 = inlined_call_operand.hbm [shape: bf16[32,128], index: 1, kind: input, shape index: {}]
  %s2 = inlined_call_operand.vmem [shape: f32[1,128], index: 2, kind: input, shape index: {}]
  %s3 = inlined_call_operand.hbm [shape: f32[16,128], index: 3, kind: output, shape index: {}]
  %s4 = sld [smem:[#allocation0]]
  $region38: #{tpu_custom_call.1} parent=0
    _
  %s6 = ssub.s32 1, %s4
  %s7 = scalar_select 0, %s6, %s4
  $region1: #{tpu_custom_call.1} parent=0
    #allocation3 [shape = 'u8[8192]{0}', space=vmem, size = 0x2000, scoped, tag = 'input window, operand 0, single buffered']
    #allocation4 [shape = 's32[1]{0}', space=sflag, size = 0x4, scoped, tag = 'scoped memory for tpu_custom_call.1']
    #allocation5 [shape = 's32[1]{0}', space=sflag, size = 0x4, scoped, tag = 'scoped memory for tpu_custom_call.1']
    #allocation6 [shape = 'u8[8192]{0}', space=vmem, size = 0x2000, scoped, tag = 'input window, operand 1, single buffered']
    #allocation7 [shape = 's32[1]{0}', space=sflag, size = 0x4, scoped, tag = 'scoped memory for tpu_custom_call.1']
    #allocation8 [shape = 'u8[8192]{0}', space=vmem, size = 0x2000, scoped, tag = 'output window, operand 0, single buffered']
    %8 = vsyncpa [#allocation4], 0
    %9 = vsyncpa [#allocation7], 0
    %10 = vsyncpa [#allocation5], 0
    // Predicated region
    $region2: #{tpu_custom_call.1} parent=1 // pred_check
      _
    $region3: #{tpu_custom_call.1} parent=1 // pred_check_branch
      %12 = sbr.rel (0) target = $region5
    $region4: #{tpu_custom_call.1} parent=1 // pred_region
      %s14 = ssub.s32 256, 256
      %15 = vsyncadd [#allocation4], %s14
      %s16 = sshll.u32 [#allocation3], 4
      %s17 = int_to_ptr.vmem [resolvable:$true] %s16
      %22 = dma.hbm_to_vmem [thread:$0]  %s0, 256, %s17, [#allocation4], 128, 128, 8
    $region5: #{tpu_custom_call.1} parent=1 // pred_fallthru
      _
    // Predicated region
    $region6: #{tpu_custom_call.1} parent=1 // pred_check
      _
    $region7: #{tpu_custom_call.1} parent=1 // pred_check_branch
      %24 = sbr.rel (0) target = $region9
    $region8: #{tpu_custom_call.1} parent=1 // pred_region
      %s26 = ssub.s32 256, 256
      %27 = vsyncadd [#allocation7], %s26
      %s28 = sshll.u32 [#allocation6], 4
      %s29 = int_to_ptr.vmem [resolvable:$true] %s28
      %34 = dma.hbm_to_vmem [thread:$0]  %s1, 256, %s29, [#allocation7], 64, 64, 4
    $region9: #{tpu_custom_call.1} parent=1 // pred_fallthru
      _
    // Predicated region
    $region10: #{tpu_custom_call.1} parent=1 // pred_check
      _
    $region11: #{tpu_custom_call.1} parent=1 // pred_check_branch
      %36 = sbr.rel (0) target = $region13
    $region12: #{tpu_custom_call.1} parent=1 // pred_region
      _
    $region13: #{tpu_custom_call.1} parent=1 // pred_fallthru
      _
    // Predicated region
    $region14: #{tpu_custom_call.1} parent=1 // pred_check
      _
    $region15: #{tpu_custom_call.1} parent=1 // pred_check_branch
      %38 = sbr.rel (0) target = $region17
    $region16: #{tpu_custom_call.1} parent=1 // pred_region
      %39 = dma.done [#allocation4], 256
    $region17: #{tpu_custom_call.1} parent=1 // pred_fallthru
      _
    // Predicated region
    $region18: #{tpu_custom_call.1} parent=1 // pred_check
      _
    $region19: #{tpu_custom_call.1} parent=1 // pred_check_branch
      %41 = sbr.rel (0) target = $region21
    $region20: #{tpu_custom_call.1} parent=1 // pred_region
      %42 = dma.done [#allocation7], 256
    $region21: #{tpu_custom_call.1} parent=1 // pred_fallthru
      _
    %p44 = scmp.eq.s32.totalorder 0, 0
    // Predicated region
    $region22: #{tpu_custom_call.1} parent=1 // pred_check
      %p45 = pneg %p44
    $region23: #{tpu_custom_call.1} parent=1 // pred_check_branch
      %47 = sbr.rel (%p45) target = $region25
    $region24: #{tpu_custom_call.1} parent=1 // pred_region
      %48 = vst [vmem:[#allocation2] sm:$0xff] 0.0
      %49 = vst [vmem:[#allocation2 + $0x8] sm:$0xff] 0.0
    $region25: #{tpu_custom_call.1} parent=1 // pred_fallthru
      _
    %v50 = vld [vmem:[#allocation2] sm:$0xff]
    %v51 = vld [vmem:[#allocation2 + $0x8] sm:$0xff]
    %v52 = vld [vmem:[#allocation3] sm:$0xff]
    %v53 = vld [vmem:[#allocation3 + $0x8] sm:$0xff]
    %v54 = vpack.c.bf16 %v53, %v52
    %v55 = vld [vmem:[#allocation6] sm:$0xf]
    %v56 = vld [vmem:[#allocation6 + $0x4] sm:$0xf]
    %v57 = vld [vmem:[#allocation6 + $0x8] sm:$0xf]
    %v58 = vld [vmem:[#allocation6 + $0xc] sm:$0xf]
    %v63 = vunpack.c.l.b16 %v55
    %v64 = vunpack.c.l.b16 %v56
    %v65 = vunpack.c.l.b16 %v57
    %v66 = vunpack.c.l.b16 %v58
    %v67 = vpack.c.b16 %v64, %v63
    %v68 = vpack.c.b16 %v66, %v65
    %vm71 = vcmask 261120
    %v73 = vsel %vm71, %v54, 0
    %75 = vmatprep.subr.bf16.mxu0 0
    %76 = vmatpush1.bf16.msra.mxu0 %v67
    %77 = vmatprep.subr.bf16.mxu0 0
    %78 = vmatpush1.bf16.msra.mxu0 %v68
    %79 = vmatprep.subr.bf16.mxu0 0
    %80 = vmatpush1.bf16.msra.mxu0 0
    %81 = vmatprep.subr.bf16.mxu0 0
    %82 = vmatpush1.bf16.msra.mxu0 0
    %83 = vmatprep.subr.bf16.mxu0 0
    %84 = vmatpush1.bf16.msra.mxu0 0
    %85 = vmatprep.subr.bf16.mxu0 0
    %86 = vmatpush1.bf16.msra.mxu0 0
    %87 = vmatprep.subr.bf16.mxu0 0
    %88 = vmatpush1.bf16.msra.mxu0 0
    %89 = vmatprep.subr.bf16.mxu0 0
    %90 = vmatpush1.bf16.msra.mxu0 0
    %91 = vmatprep.subr.bf16.mxu0 0
    %92 = vmatpush1.bf16.msra.mxu0 0
    %93 = vmatprep.subr.bf16.mxu0 0
    %94 = vmatpush1.bf16.msra.mxu0 0
    %95 = vmatprep.subr.bf16.mxu0 0
    %96 = vmatpush1.bf16.msra.mxu0 0
    %97 = vmatprep.subr.bf16.mxu0 0
    %98 = vmatpush1.bf16.msra.mxu0 0
    %99 = vmatprep.subr.bf16.mxu0 0
    %100 = vmatpush1.bf16.msra.mxu0 0
    %101 = vmatprep.subr.bf16.mxu0 0
    %102 = vmatpush1.bf16.msra.mxu0 0
    %103 = vmatprep.subr.bf16.mxu0 0
    %104 = vmatpush1.bf16.msra.mxu0 0
    %105 = vmatprep.subr.bf16.mxu0 0
    %106 = vmatpush1.bf16.msra.mxu0 0
    %107 = vmatprep.mubr.bf16.mxu0 0
    %108 = vmatmul.mubr.bf16.gmra.mrb[0].mxu0 %v73
    %v109 = vpop.f32.mrb[0].mxu0
    %v110 = vadd.f32 0.0, %v109
    %v111 = vpop.f32.mrb[0].mxu0
    %v112 = vpop.f32.mrb[0].mxu0
    %v113 = vadd.f32 0.0, %v112
    %v114 = vpop.f32.mrb[0].mxu0
    %115 = vdwg.mxu0
    %v116 = vadd.f32 %v50, %v110
    %v117 = vadd.f32 %v51, %v113
    %118 = vst [vmem:[#allocation2] sm:$0xff] %v116
    %119 = vst [vmem:[#allocation2 + $0x8] sm:$0xff] %v117
    // Predicated region
    $region26: #{tpu_custom_call.1} parent=1 // pred_check
      %p120 = pneg %p44
    $region27: #{tpu_custom_call.1} parent=1 // pred_check_branch
      %122 = sbr.rel (%p120) target = $region29
    $region28: #{tpu_custom_call.1} parent=1 // pred_region
      %v123 = vld [vmem:[#allocation2] sm:$0xff]
      %v124 = vld [vmem:[#allocation2 + $0x8] sm:$0xff]
      %v125 = vld [vmem:[%s2] sm:$0x1]
      %v127 = vlaneseq
      %v128 = vshrl.u32 %v127, 7
      %v129 = vsub.s32 0, %v128
      %v130 = vrot.slane %v125, %v129
      %v132 = vadd.f32 %v123, %v130
      %v133 = vadd.f32 %v124, %v130
      %134 = vst [vmem:[#allocation8] sm:$0xff] %v132
      %135 = vst [vmem:[#allocation8 + $0x8] sm:$0xff] %v133
    $region29: #{tpu_custom_call.1} parent=1 // pred_fallthru
      _
    // Predicated region
    $region30: #{tpu_custom_call.1} parent=1 // pred_check
      _
    $region31: #{tpu_custom_call.1} parent=1 // pred_check_branch
      %137 = sbr.rel (0) target = $region33
    $region32: #{tpu_custom_call.1} parent=1 // pred_region
      %s139 = ssub.s32 256, 256
      %140 = vsyncadd [#allocation5], %s139
      %s141 = sshll.u32 [#allocation8], 4
      %s142 = int_to_ptr.vmem [resolvable:$true] %s141
      %147 = dma.vmem_to_hbm [thread:$0]  %s142, 256, %s3, [#allocation5], 128, 128, 8
    $region33: #{tpu_custom_call.1} parent=1 // pred_fallthru
      _
    // Predicated region
    $region34: #{tpu_custom_call.1} parent=1 // pred_check
      _
    $region35: #{tpu_custom_call.1} parent=1 // pred_check_branch
      %149 = sbr.rel (0) target = $region37
    $region36: #{tpu_custom_call.1} parent=1 // pred_region
      %150 = dma.done [#allocation5], 256
    $region37: #{tpu_custom_call.1} parent=1 // pred_fallthru
      _
    %151 = vsyncpa [#allocation4], 1
    %152 = vsyncpa [#allocation7], 1
    %153 = vsyncpa [#allocation5], 1

</llo_original>
